<compile_context>
chip_gen: v7x
topology: tpu7x:2x2x1
jax: 0.10.0
libtpu: 0.0.40
codegen_flags: <defaults>
</compile_context>

<pallas_src>
import functools

import jax
import jax.numpy as jnp
from jax import lax
from jax.experimental import pallas as pl
from jax.experimental.pallas import tpu as pltpu

N_BINS = 15          # same default as the PyTorch module
NBP = 128            # bins padded to one full lane register; padded bins
                     # (b >= n_bins) can never be matched because
                     # bin_id = ceil(conf * n_bins) - 1 <= n_bins - 1.


def _round_up(x, m):
    return (x + m - 1) // m * m


def _ece_kernel(probs_ref, labels_ref, out_ref, *, n_bins, n_rows):
    p = probs_ref[...]                                          # (TM, C) f32
    lab = labels_ref[...]                                       # (TM, 1) i32
    tm, ncls = p.shape

    # confidences = row max; predictions = first argmax (torch.max semantics).
    conf = jnp.max(p, axis=1, keepdims=True)                    # (TM, 1)
    col = lax.broadcasted_iota(jnp.int32, (1, ncls), 1)         # (1, C) broadcast
    pred = jnp.min(jnp.where(p == conf, col, ncls),
                   axis=1, keepdims=True)                       # (TM, 1)
    correct = (pred == lab).astype(jnp.float32)                 # (TM, 1) in {0,1}

    # Tail masking by global row index: the ragged last block reads
    # unspecified data past the end of the array; force its confidence to 0
    # so those rows match no bin and contribute 0 to both sums (this also
    # neutralizes any NaN/Inf garbage before it can touch a reduction).
    row = pl.program_id(0) * tm + lax.broadcasted_iota(jnp.int32, (tm, 1), 0)
    conf = jnp.where(row < n_rows, conf, 0.0)

    # One-compare bucketing: bin b covers (b/n_bins, (b+1)/n_bins], i.e.
    # bin_id = ceil(conf * n_bins) - 1; conf == 0 -> bin_id == -1 -> no bin,
    # matching torch's strict conf > bin_lower for bin 0.
    bin_id = (jnp.ceil(conf * float(n_bins)) - 1.0).astype(jnp.int32)  # (TM, 1)
    bins = lax.broadcasted_iota(jnp.int32, (1, NBP), 1)                # (1, NBP)
    in_bin = (bin_id == bins).astype(jnp.float32)                      # (TM, NBP)

    # Exact f32 VPU sums (no MXU / no reduced-precision dot).
    csum = jnp.sum(conf * in_bin, axis=0, keepdims=True)        # (1, NBP)
    asum = jnp.sum(correct * in_bin, axis=0, keepdims=True)     # (1, NBP)
    out_ref[...] = jnp.concatenate([csum, asum], axis=0)        # (2, NBP)


def ece_loss(probs, labels, n_bins=N_BINS, block_rows=None,
             vmem_budget_bytes=8 << 20):
    """Pallas ECE: probs (N, C) float32, labels (N,) int32 -> (1,) float32."""
    n, c = probs.shape
    probs = probs.astype(jnp.float32)
    labels2d = labels.astype(jnp.int32).reshape(n, 1)

    if block_rows is None:
        # Per-row VMEM cost WITH lane padding and in-kernel intermediates:
        #   * probs tile (TM, C) f32, lane-padded to a multiple of 128,
        #     double-buffered,
        #   * labels tile (TM, 1) i32, lane-padded to 128, double-buffered,
        #   * (TM, C)-shaped temps for the argmax compare/select,
        #   * ~6 (TM, 128)-shaped temps (in_bin, products, conf/correct/bin_id
        #     columns, iota).
        c_pad = _round_up(c, 128)
        lane = 128 * 4
        per_row = 2 * c_pad * 4 + 2 * lane + 2 * c_pad * 4 + 6 * lane
        block_rows = int(vmem_budget_bytes // per_row)
        # Measured data: >= ~512-row tiles already sit at ~85% of the HBM
        # roofline, and 2048 keeps the footprint far under the default scoped
        # VMEM on every generation (v5e 16 MiB, v6e/v7x 32 MiB).
        block_rows = min(block_rows, 2048)
        # Give v7x's two TensorCores >= ~8 grid steps on large problems.
        block_rows = min(block_rows, max(512, _round_up(pl.cdiv(n, 8), 8)))

    block_rows = int(block_rows)
    if block_rows >= n:
        # Single full-extent block (allowed even when n is not a multiple
        # of 8); the in-kernel mask is then a no-op.
        block_rows = n
    else:
        block_rows = max(8, (block_rows // 8) * 8)

    grid = pl.cdiv(n, block_rows)   # no jnp.pad: ragged tail masked in-kernel
    kernel = functools.partial(_ece_kernel, n_bins=n_bins, n_rows=n)

    partials = pl.pallas_call(
        kernel,
        out_shape=jax.ShapeDtypeStruct((grid, 2, NBP), jnp.float32),
        grid_spec=pltpu.PrefetchScalarGridSpec(
            num_scalar_prefetch=0,
            grid=(grid,),
            in_specs=[
                pl.BlockSpec((block_rows, c), lambda i: (i, 0)),
                pl.BlockSpec((block_rows, 1), lambda i: (i, 0)),
            ],
            # Each block writes its own partial -> the grid axis is truly
            # parallel (sharded across both TensorCores on v7x).
            out_specs=pl.BlockSpec((None, 2, NBP), lambda i: (i, 0, 0)),
        ),
        compiler_params=pltpu.CompilerParams(
            dimension_semantics=("parallel",),
        ),
    )(probs, labels2d)

    # Tiny epilogue: sum(|avg_conf - acc| * prop) == sum(|csum - asum|) / N,
    # and empty bins contribute 0 automatically (csum == asum == 0).
    totals = jnp.sum(partials, axis=0)                          # (2, NBP)
    return (jnp.sum(jnp.abs(totals[0] - totals[1])) / float(n)).reshape(1)


def ece_ref(probs, labels, n_bins=N_BINS):
    """Pure-JAX reference mirroring the PyTorch forward."""
    conf = jnp.max(probs, axis=1)
    pred = jnp.argmax(probs, axis=1)
    acc = (pred == labels).astype(jnp.float32)
    boundaries = jnp.linspace(0.0, 1.0, n_bins + 1)
    ece = jnp.zeros((1,), jnp.float32)
    for b in range(n_bins):
        lo, hi = boundaries[b], boundaries[b + 1]
        in_bin = (conf > lo) & (conf <= hi)
        prop = jnp.mean(in_bin.astype(jnp.float32))
        cnt = jnp.sum(in_bin.astype(jnp.float32))
        acc_in = jnp.sum(acc * in_bin) / jnp.maximum(cnt, 1.0)
        conf_in = jnp.sum(conf * in_bin) / jnp.maximum(cnt, 1.0)
        ece = ece + jnp.where(cnt > 0, jnp.abs(conf_in - acc_in) * prop, 0.0)
    return ece


if __name__ == "__main__":
    key = jax.random.PRNGKey(0)
    k1, k2 = jax.random.split(key)

    N, C = 128, 10
    logits = jax.random.normal(k1, (N, C), dtype=jnp.float32) * 2.0
    probs = jax.nn.softmax(logits, axis=1)
    labels = jax.random.randint(k2, (N,), 0, C, dtype=jnp.int32)

    out = ece_loss(probs, labels)
    jax.block_until_ready(out)

    ref = ece_ref(probs, labels)
    assert out.shape == (1,)
    assert jnp.allclose(out, ref, atol=1e-5), (out, ref)

    # Also exercise the ragged-tail path (N not a multiple of 8 / block size).
    N2 = 100
    probs2 = jax.nn.softmax(jax.random.normal(k1, (N2, C), jnp.float32) * 2.0, axis=1)
    labels2 = jax.random.randint(k2, (N2,), 0, C, dtype=jnp.int32)
    out2 = ece_loss(probs2, labels2)
    jax.block_until_ready(out2)
    assert jnp.allclose(out2, ece_ref(probs2, labels2), atol=1e-5), (out2,)

    # And a case where the grid has several blocks with a ragged last block.
    N3, BR = 1000, 96
    probs3 = jax.nn.softmax(jax.random.normal(k1, (N3, C), jnp.float32) * 2.0, axis=1)
    labels3 = jax.random.randint(k2, (N3,), 0, C, dtype=jnp.int32)
    out3 = ece_loss(probs3, labels3, block_rows=BR)
    jax.block_until_ready(out3)
    assert jnp.allclose(out3, ece_ref(probs3, labels3), atol=1e-5), (out3,)

    print("KERNEL_OK")
</pallas_src>

<mosaic_0001>
module attributes {stable_mosaic.version = 11 : i64} {
  func.func @_ece_kernel(%arg0: i32, %arg1: memref<128x10xf32, #tpu.memory_space<vmem>>, %arg2: memref<128x1xi32, #tpu.memory_space<vmem>>, %arg3: memref<1x2x128xf32, #tpu.memory_space<vmem>>) attributes {dimension_semantics = [#tpu.dimension_semantics<parallel>], iteration_bounds = array<i64: 1>, scalar_prefetch = 0 : i64, scratch_operands = 0 : i64, tpu.core_type = #tpu.core_type<tc>, window_params = [{transform_indices = @transform_0, window_bounds = array<i64: 128, 10>}, {transform_indices = @transform_1, window_bounds = array<i64: 128, 1>}, {transform_indices = @transform_2, window_bounds = array<i64: 1, 2, 128>}]} {
    %c0 = arith.constant 0 : index
    %c0_0 = arith.constant 0 : index
    %0 = vector.load %arg1[%c0, %c0_0] : memref<128x10xf32, #tpu.memory_space<vmem>>, vector<128x10xf32>
    %c0_1 = arith.constant 0 : index
    %c0_2 = arith.constant 0 : index
    %1 = vector.load %arg2[%c0_1, %c0_2] : memref<128x1xi32, #tpu.memory_space<vmem>>, vector<128x1xi32>
    %cst = arith.constant dense<0xFF800000> : vector<128xf32>
    %2 = vector.multi_reduction <maximumf>, %0, %cst [1] : vector<128x10xf32> to vector<128xf32>
    %3 = vector.shape_cast %2 : vector<128xf32> to vector<128x1xf32>
    %4 = tpu.iota {dimensions = array<i32: 1>} : vector<1x10xi32>
    %5 = vector.broadcast %3 : vector<128x1xf32> to vector<128x10xf32>
    %6 = arith.cmpf oeq, %0, %5 : vector<128x10xf32>
    %c10_i32 = arith.constant 10 : i32
    %7 = vector.shape_cast %4 : vector<1x10xi32> to vector<1x10xi32>
    %8 = vector.broadcast %7 : vector<1x10xi32> to vector<128x10xi32>
    %9 = vector.broadcast %c10_i32 : i32 to vector<128x10xi32>
    %10 = arith.select %6, %8, %9 : vector<128x10xi1>, vector<128x10xi32>
    %cst_3 = arith.constant dense<2147483647> : vector<128xi32>
    %11 = vector.multi_reduction <minsi>, %10, %cst_3 [1] : vector<128x10xi32> to vector<128xi32>
    %12 = vector.shape_cast %11 : vector<128xi32> to vector<128x1xi32>
    %13 = arith.cmpi eq, %12, %1 : vector<128x1xi32>
    %14 = arith.extui %13 : vector<128x1xi1> to vector<128x1xi32>
    %15 = arith.sitofp %14 : vector<128x1xi32> to vector<128x1xf32>
    %c128_i32 = arith.constant 128 : i32
    %16 = arith.muli %arg0, %c128_i32 : i32
    %17 = tpu.iota {dimensions = array<i32: 0>} : vector<128x1xi32>
    %18 = vector.broadcast %16 : i32 to vector<128x1xi32>
    %19 = arith.addi %18, %17 : vector<128x1xi32>
    %c128_i32_4 = arith.constant 128 : i32
    %20 = vector.broadcast %c128_i32_4 : i32 to vector<128x1xi32>
    %21 = arith.cmpi slt, %19, %20 : vector<128x1xi32>
    %cst_5 = arith.constant 0.000000e+00 : f32
    %22 = vector.broadcast %cst_5 : f32 to vector<128x1xf32>
    %23 = arith.select %21, %3, %22 : vector<128x1xi1>, vector<128x1xf32>
    %cst_6 = arith.constant 1.500000e+01 : f32
    %24 = vector.broadcast %cst_6 : f32 to vector<128x1xf32>
    %25 = arith.mulf %23, %24 : vector<128x1xf32>
    %26 = math.ceil %25 : vector<128x1xf32>
    %cst_7 = arith.constant 1.000000e+00 : f32
    %27 = vector.broadcast %cst_7 : f32 to vector<128x1xf32>
    %28 = arith.subf %26, %27 : vector<128x1xf32>
    %29 = arith.fptosi %28 : vector<128x1xf32> to vector<128x1xi32>
    %30 = tpu.iota {dimensions = array<i32: 1>} : vector<1x128xi32>
    %31 = vector.broadcast %29 : vector<128x1xi32> to vector<128x128xi32>
    %32 = vector.broadcast %30 : vector<1x128xi32> to vector<128x128xi32>
    %33 = arith.cmpi eq, %31, %32 : vector<128x128xi32>
    %34 = arith.extui %33 : vector<128x128xi1> to vector<128x128xi32>
    %35 = arith.sitofp %34 : vector<128x128xi32> to vector<128x128xf32>
    %36 = vector.broadcast %23 : vector<128x1xf32> to vector<128x128xf32>
    %37 = arith.mulf %36, %35 : vector<128x128xf32>
    %cst_8 = arith.constant dense<0.000000e+00> : vector<128xf32>
    %38 = vector.multi_reduction <add>, %37, %cst_8 [0] : vector<128x128xf32> to vector<128xf32>
    %39 = vector.shape_cast %38 : vector<128xf32> to vector<1x128xf32>
    %40 = vector.broadcast %15 : vector<128x1xf32> to vector<128x128xf32>
    %41 = arith.mulf %40, %35 : vector<128x128xf32>
    %cst_9 = arith.constant dense<0.000000e+00> : vector<128xf32>
    %42 = vector.multi_reduction <add>, %41, %cst_9 [0] : vector<128x128xf32> to vector<128xf32>
    %43 = vector.shape_cast %42 : vector<128xf32> to vector<1x128xf32>
    %44 = tpu.concatenate %39, %43 in 0 : vector<1x128xf32>, vector<1x128xf32> -> vector<2x128xf32>
    %c0_10 = arith.constant 0 : index
    %c0_11 = arith.constant 0 : index
    %c0_12 = arith.constant 0 : index
    %45 = vector.load %arg3[%c0_10, %c0_11, %c0_12] : memref<1x2x128xf32, #tpu.memory_space<vmem>>, vector<1x2x128xf32>
    %46 = vector.shape_cast %45 : vector<1x2x128xf32> to vector<2x128xf32>
    %47 = vector.shape_cast %44 : vector<2x128xf32> to vector<1x2x128xf32>
    tpu.vector_store %arg3[%c0_10, %c0_11, %c0_12], %47 {strides = array<i32>} : memref<1x2x128xf32, #tpu.memory_space<vmem>>, vector<1x2x128xf32>,
    return
  }
  func.func @transform_0(%arg0: i32) -> (i32, i32) {
    %c0_i32 = arith.constant 0 : i32
    %c0_i32_0 = arith.constant 0 : i32
    return %arg0, %c0_i32 : i32, i32
  }
  func.func @transform_1(%arg0: i32) -> (i32, i32) {
    %c0_i32 = arith.constant 0 : i32
    %c0_i32_0 = arith.constant 0 : i32
    return %arg0, %c0_i32 : i32, i32
  }
  func.func @transform_2(%arg0: i32) -> (i32, i32, i32) {
    %c0_i32 = arith.constant 0 : i32
    %c0_i32_0 = arith.constant 0 : i32
    %c0_i32_1 = arith.constant 0 : i32
    return %arg0, %c0_i32, %c0_i32_0 : i32, i32, i32
  }
}

</mosaic_0001>

<llo_original>
// kernel: tpu_custom_call.1
$region0: #{tpu_custom_call.1}
  #allocation0 [shape = 'u32[]', space=smem, size = 0x4, offset = 0x4, fixed_abs, tag = 'smem constant byte address 0x4 - core index']
  #allocation1 [shape = 'u32[144,128]{1,0:T(1,128)}', space=vmem, size = 0x12000, scoped, tag = 'internal scratch']
  %s0 = inlined_call_operand.vmem [shape: f32[128,10], index: 0, kind: input, shape index: {}]
  %s1 = inlined_call_operand.vmem [shape: s32[128,1], index: 1, kind: input, shape index: {}]
  %s2 = inlined_call_operand.hbm [shape: f32[1,2,128], index: 2, kind: output, shape index: {}]
  %s3 = sld [smem:[#allocation0]]
  $region18: #{tpu_custom_call.1} parent=0
    _
  %s5 = ssub.s32 1, %s3
  %s6 = scalar_select 0, %s5, %s3
  $region1: #{tpu_custom_call.1} parent=0
    #allocation2 [shape = 'u8[1024]{0}', space=vmem, size = 0x400, scoped, tag = 'output window, operand 0, single buffered']
    #allocation3 [shape = 's32[1]{0}', space=sflag, size = 0x4, scoped, tag = 'scoped memory for tpu_custom_call.1']
    %7 = vsyncpa [#allocation3], 0
    // Predicated region
    $region2: #{tpu_custom_call.1} parent=1 // pred_check
      _
    $region3: #{tpu_custom_call.1} parent=1 // pred_check_branch
      %9 = sbr.rel (0) target = $region5
    $region4: #{tpu_custom_call.1} parent=1 // pred_region
      _
    $region5: #{tpu_custom_call.1} parent=1 // pred_fallthru
      _
    // Predicated region
    $region6: #{tpu_custom_call.1} parent=1 // pred_check
      _
    $region7: #{tpu_custom_call.1} parent=1 // pred_check_branch
      %11 = sbr.rel (0) target = $region9
    $region8: #{tpu_custom_call.1} parent=1 // pred_region
      _
    $region9: #{tpu_custom_call.1} parent=1 // pred_fallthru
      _
    %v12 = vld [vmem:[%s0] sm:$0xff]
    %v13 = vld [vmem:[%s0 + $0x8] sm:$0xff]
    %v14 = vld [vmem:[%s0 + $0x10] sm:$0xff]
    %v15 = vld [vmem:[%s0 + $0x18] sm:$0xff]
    %v16 = vld [vmem:[%s0 + $0x20] sm:$0xff]
    %v17 = vld [vmem:[%s0 + $0x28] sm:$0xff]
    %v18 = vld [vmem:[%s0 + $0x30] sm:$0xff]
    %v19 = vld [vmem:[%s0 + $0x38] sm:$0xff]
    %v20 = vld [vmem:[%s0 + $0x40] sm:$0xff]
    %v21 = vld [vmem:[%s0 + $0x48] sm:$0xff]
    %v22 = vld [vmem:[%s0 + $0x50] sm:$0xff]
    %v23 = vld [vmem:[%s0 + $0x58] sm:$0xff]
    %v24 = vld [vmem:[%s0 + $0x60] sm:$0xff]
    %v25 = vld [vmem:[%s0 + $0x68] sm:$0xff]
    %v26 = vld [vmem:[%s0 + $0x70] sm:$0xff]
    %v27 = vld [vmem:[%s0 + $0x78] sm:$0xff]
    %v28 = vld [vmem:[%s1] sm:$0xff]
    %v29 = vld [vmem:[%s1 + $0x8] sm:$0xff]
    %v30 = vld [vmem:[%s1 + $0x10] sm:$0xff]
    %v31 = vld [vmem:[%s1 + $0x18] sm:$0xff]
    %v32 = vld [vmem:[%s1 + $0x20] sm:$0xff]
    %v33 = vld [vmem:[%s1 + $0x28] sm:$0xff]
    %v34 = vld [vmem:[%s1 + $0x30] sm:$0xff]
    %v35 = vld [vmem:[%s1 + $0x38] sm:$0xff]
    %v36 = vld [vmem:[%s1 + $0x40] sm:$0xff]
    %v37 = vld [vmem:[%s1 + $0x48] sm:$0xff]
    %v38 = vld [vmem:[%s1 + $0x50] sm:$0xff]
    %v39 = vld [vmem:[%s1 + $0x58] sm:$0xff]
    %v40 = vld [vmem:[%s1 + $0x60] sm:$0xff]
    %v41 = vld [vmem:[%s1 + $0x68] sm:$0xff]
    %v42 = vld [vmem:[%s1 + $0x70] sm:$0xff]
    %v43 = vld [vmem:[%s1 + $0x78] sm:$0xff]
    %vm44 = vcmask 80896
    %v45 = vsel %vm44, %v12, -inf
    %46 = vmax.xlane.f32.xlu0 %v45
    %v47 = vpop.xlane.xlu0 %46
    %v48 = vsel %vm44, %v13, -inf
    %49 = vmax.xlane.f32.xlu0 %v48
    %v50 = vpop.xlane.xlu0 %49
    %v51 = vsel %vm44, %v14, -inf
    %52 = vmax.xlane.f32.xlu0 %v51
    %v53 = vpop.xlane.xlu0 %52
    %v54 = vsel %vm44, %v15, -inf
    %55 = vmax.xlane.f32.xlu0 %v54
    %v56 = vpop.xlane.xlu0 %55
    %v57 = vsel %vm44, %v16, -inf
    %58 = vmax.xlane.f32.xlu0 %v57
    %v59 = vpop.xlane.xlu0 %58
    %v60 = vsel %vm44, %v17, -inf
    %61 = vmax.xlane.f32.xlu0 %v60
    %v62 = vpop.xlane.xlu0 %61
    %v63 = vsel %vm44, %v18, -inf
    %64 = vmax.xlane.f32.xlu0 %v63
    %v65 = vpop.xlane.xlu0 %64
    %v66 = vsel %vm44, %v19, -inf
    %67 = vmax.xlane.f32.xlu0 %v66
    %v68 = vpop.xlane.xlu0 %67
    %v69 = vsel %vm44, %v20, -inf
    %70 = vmax.xlane.f32.xlu0 %v69
    %v71 = vpop.xlane.xlu0 %70
    %v72 = vsel %vm44, %v21, -inf
    %73 = vmax.xlane.f32.xlu0 %v72
    %v74 = vpop.xlane.xlu0 %73
    %v75 = vsel %vm44, %v22, -inf
    %76 = vmax.xlane.f32.xlu0 %v75
    %v77 = vpop.xlane.xlu0 %76
    %v78 = vsel %vm44, %v23, -inf
    %79 = vmax.xlane.f32.xlu0 %v78
    %v80 = vpop.xlane.xlu0 %79
    %v81 = vsel %vm44, %v24, -inf
    %82 = vmax.xlane.f32.xlu0 %v81
    %v83 = vpop.xlane.xlu0 %82
    %v84 = vsel %vm44, %v25, -inf
    %85 = vmax.xlane.f32.xlu0 %v84
    %v86 = vpop.xlane.xlu0 %85
    %v87 = vsel %vm44, %v26, -inf
    %88 = vmax.xlane.f32.xlu0 %v87
    %v89 = vpop.xlane.xlu0 %88
    %v90 = vsel %vm44, %v27, -inf
    %91 = vmax.xlane.f32.xlu0 %v90
    %v92 = vpop.xlane.xlu0 %91
    %v93 = vlaneseq
    %v94 = vand.u32 %v93, 127
    %vm95 = vcmp.eq.f32.partialorder %v12, %v47
    %vm96 = vcmp.eq.f32.partialorder %v13, %v50
    %vm97 = vcmp.eq.f32.partialorder %v14, %v53
    %vm98 = vcmp.eq.f32.partialorder %v15, %v56
    %vm99 = vcmp.eq.f32.partialorder %v16, %v59
    %vm100 = vcmp.eq.f32.partialorder %v17, %v62
    %vm101 = vcmp.eq.f32.partialorder %v18, %v65
    %vm102 = vcmp.eq.f32.partialorder %v19, %v68
    %vm103 = vcmp.eq.f32.partialorder %v20, %v71
    %vm104 = vcmp.eq.f32.partialorder %v21, %v74
    %vm105 = vcmp.eq.f32.partialorder %v22, %v77
    %vm106 = vcmp.eq.f32.partialorder %v23, %v80
    %vm107 = vcmp.eq.f32.partialorder %v24, %v83
    %vm108 = vcmp.eq.f32.partialorder %v25, %v86
    %vm109 = vcmp.eq.f32.partialorder %v26, %v89
    %vm110 = vcmp.eq.f32.partialorder %v27, %v92
    %v111 = vsel %vm95, %v94, 10
    %v112 = vsel %vm96, %v94, 10
    %v113 = vsel %vm97, %v94, 10
    %v114 = vsel %vm98, %v94, 10
    %v115 = vsel %vm99, %v94, 10
    %v116 = vsel %vm100, %v94, 10
    %v117 = vsel %vm101, %v94, 10
    %v118 = vsel %vm102, %v94, 10
    %v119 = vsel %vm103, %v94, 10
    %v120 = vsel %vm104, %v94, 10
    %v121 = vsel %vm105, %v94, 10
    %v122 = vsel %vm106, %v94, 10
    %v123 = vsel %vm107, %v94, 10
    %v124 = vsel %vm108, %v94, 10
    %v125 = vsel %vm109, %v94, 10
    %v126 = vsel %vm110, %v94, 10
    %v127 = vsel %vm44, %v111, 2147483647
    %v128 = vand.u32 %v127, 65535
    %v129 = vshra.s32 %v127, 16
    %v130 = vcvt.s32.f32 %v128
    %v131 = vcvt.s32.f32 %v129
    %132 = vmin.xlane.f32.xlu0 %v131
    %v133 = vpop.xlane.xlu0 %132
    %vm134 = vcmp.eq.f32.partialorder %v131, %v133
    %v135 = vsel %vm134, %v130, inf
    %136 = vmin.xlane.f32.xlu0 %v135
    %v137 = vpop.xlane.xlu0 %136
    %v138 = vcvt.f32.s32 %v137
    %v139 = vcvt.f32.s32 %v133
    %v140 = vshll.u32 %v139, 16
    %v141 = vadd.s32 %v140, %v138
    %v142 = vsel %vm44, %v112, 2147483647
    %v143 = vand.u32 %v142, 65535
    %v144 = vshra.s32 %v142, 16
    %v145 = vcvt.s32.f32 %v143
    %v146 = vcvt.s32.f32 %v144
    %147 = vmin.xlane.f32.xlu0 %v146
    %v148 = vpop.xlane.xlu0 %147
    %vm149 = vcmp.eq.f32.partialorder %v146, %v148
    %v150 = vsel %vm149, %v145, inf
    %151 = vmin.xlane.f32.xlu0 %v150
    %v152 = vpop.xlane.xlu0 %151
    %v153 = vcvt.f32.s32 %v152
    %v154 = vcvt.f32.s32 %v148
    %v155 = vshll.u32 %v154, 16
    %v156 = vadd.s32 %v155, %v153
    %v157 = vsel %vm44, %v113, 2147483647
    %v158 = vand.u32 %v157, 65535
    %v159 = vshra.s32 %v157, 16
    %v160 = vcvt.s32.f32 %v158
    %v161 = vcvt.s32.f32 %v159
    %162 = vmin.xlane.f32.xlu0 %v161
    %v163 = vpop.xlane.xlu0 %162
    %vm164 = vcmp.eq.f32.partialorder %v161, %v163
    %v165 = vsel %vm164, %v160, inf
    %166 = vmin.xlane.f32.xlu0 %v165
    %v167 = vpop.xlane.xlu0 %166
    %v168 = vcvt.f32.s32 %v167
    %v169 = vcvt.f32.s32 %v163
    %v170 = vshll.u32 %v169, 16
    %v171 = vadd.s32 %v170, %v168
    %v172 = vsel %vm44, %v114, 2147483647
    %v173 = vand.u32 %v172, 65535
    %v174 = vshra.s32 %v172, 16
    %v175 = vcvt.s32.f32 %v173
    %v176 = vcvt.s32.f32 %v174
    %177 = vmin.xlane.f32.xlu0 %v176
    %v178 = vpop.xlane.xlu0 %177
    %vm179 = vcmp.eq.f32.partialorder %v176, %v178
    %v180 = vsel %vm179, %v175, inf
    %181 = vmin.xlane.f32.xlu0 %v180
    %v182 = vpop.xlane.xlu0 %181
    %v183 = vcvt.f32.s32 %v182
    %v184 = vcvt.f32.s32 %v178
    %v185 = vshll.u32 %v184, 16
    %v186 = vadd.s32 %v185, %v183
    %v187 = vsel %vm44, %v115, 2147483647
    %v188 = vand.u32 %v187, 65535
    %v189 = vshra.s32 %v187, 16
    %v190 = vcvt.s32.f32 %v188
    %v191 = vcvt.s32.f32 %v189
    %192 = vmin.xlane.f32.xlu0 %v191
    %v193 = vpop.xlane.xlu0 %192
    %vm194 = vcmp.eq.f32.partialorder %v191, %v193
    %v195 = vsel %vm194, %v190, inf
    %196 = vmin.xlane.f32.xlu0 %v195
    %v197 = vpop.xlane.xlu0 %196
    %v198 = vcvt.f32.s32 %v197
    %v199 = vcvt.f32.s32 %v193
    %v200 = vshll.u32 %v199, 16
    %v201 = vadd.s32 %v200, %v198
    %v202 = vsel %vm44, %v116, 2147483647
    %v203 = vand.u32 %v202, 65535
    %v204 = vshra.s32 %v202, 16
    %v205 = vcvt.s32.f32 %v203
    %v206 = vcvt.s32.f32 %v204
    %207 = vmin.xlane.f32.xlu0 %v206
    %v208 = vpop.xlane.xlu0 %207
    %vm209 = vcmp.eq.f32.partialorder %v206, %v208
    %v210 = vsel %vm209, %v205, inf
    %211 = vmin.xlane.f32.xlu0 %v210
    %v212 = vpop.xlane.xlu0 %211
    %v213 = vcvt.f32.s32 %v212
    %v214 = vcvt.f32.s32 %v208
    %v215 = vshll.u32 %v214, 16
    %v216 = vadd.s32 %v215, %v213
    %v217 = vsel %vm44, %v117, 2147483647
    %v218 = vand.u32 %v217, 65535
    %v219 = vshra.s32 %v217, 16
    %v220 = vcvt.s32.f32 %v218
    %v221 = vcvt.s32.f32 %v219
    %222 = vmin.xlane.f32.xlu0 %v221
    %v223 = vpop.xlane.xlu0 %222
    %vm224 = vcmp.eq.f32.partialorder %v221, %v223
    %v225 = vsel %vm224, %v220, inf
    %226 = vmin.xlane.f32.xlu0 %v225
    %v227 = vpop.xlane.xlu0 %226
    %v228 = vcvt.f32.s32 %v227
    %v229 = vcvt.f32.s32 %v223
    %v230 = vshll.u32 %v229, 16
    %v231 = vadd.s32 %v230, %v228
    %v232 = vsel %vm44, %v118, 2147483647
    %v233 = vand.u32 %v232, 65535
    %v234 = vshra.s32 %v232, 16
    %v235 = vcvt.s32.f32 %v233
    %v236 = vcvt.s32.f32 %v234
    %237 = vmin.xlane.f32.xlu0 %v236
    %v238 = vpop.xlane.xlu0 %237
    %vm239 = vcmp.eq.f32.partialorder %v236, %v238
    %v240 = vsel %vm239, %v235, inf
    %241 = vmin.xlane.f32.xlu0 %v240
    %v242 = vpop.xlane.xlu0 %241
    %v243 = vcvt.f32.s32 %v242
    %v244 = vcvt.f32.s32 %v238
    %v245 = vshll.u32 %v244, 16
    %v246 = vadd.s32 %v245, %v243
    %v247 = vsel %vm44, %v119, 2147483647
    %v248 = vand.u32 %v247, 65535
    %v249 = vshra.s32 %v247, 16
    %v250 = vcvt.s32.f32 %v248
    %v251 = vcvt.s32.f32 %v249
    %252 = vmin.xlane.f32.xlu0 %v251
    %v253 = vpop.xlane.xlu0 %252
    %vm254 = vcmp.eq.f32.partialorder %v251, %v253
    %v255 = vsel %vm254, %v250, inf
    %256 = vmin.xlane.f32.xlu0 %v255
    %v257 = vpop.xlane.xlu0 %256
    %v258 = vcvt.f32.s32 %v257
    %v259 = vcvt.f32.s32 %v253
    %v260 = vshll.u32 %v259, 16
    %v261 = vadd.s32 %v260, %v258
    %v262 = vsel %vm44, %v120, 2147483647
    %v263 = vand.u32 %v262, 65535
    %v264 = vshra.s32 %v262, 16
    %v265 = vcvt.s32.f32 %v263
    %v266 = vcvt.s32.f32 %v264
    %267 = vmin.xlane.f32.xlu0 %v266
    %v268 = vpop.xlane.xlu0 %267
    %vm269 = vcmp.eq.f32.partialorder %v266, %v268
    %v270 = vsel %vm269, %v265, inf
    %271 = vmin.xlane.f32.xlu0 %v270
    %v272 = vpop.xlane.xlu0 %271
    %v273 = vcvt.f32.s32 %v272
    %v274 = vcvt.f32.s32 %v268
    %v275 = vshll.u32 %v274, 16
    %v276 = vadd.s32 %v275, %v273
    %v277 = vsel %vm44, %v121, 2147483647
    %v278 = vand.u32 %v277, 65535
    %v279 = vshra.s32 %v277, 16
    %v280 = vcvt.s32.f32 %v278
    %v281 = vcvt.s32.f32 %v279
    %282 = vmin.xlane.f32.xlu0 %v281
    %v283 = vpop.xlane.xlu0 %282
    %vm284 = vcmp.eq.f32.partialorder %v281, %v283
    %v285 = vsel %vm284, %v280, inf
    %286 = vmin.xlane.f32.xlu0 %v285
    %v287 = vpop.xlane.xlu0 %286
    %v288 = vcvt.f32.s32 %v287
    %v289 = vcvt.f32.s32 %v283
    %v290 = vshll.u32 %v289, 16
    %v291 = vadd.s32 %v290, %v288
    %v292 = vsel %vm44, %v122, 2147483647
    %v293 = vand.u32 %v292, 65535
    %v294 = vshra.s32 %v292, 16
    %v295 = vcvt.s32.f32 %v293
    %v296 = vcvt.s32.f32 %v294
    %297 = vmin.xlane.f32.xlu0 %v296
    %v298 = vpop.xlane.xlu0 %297
    %vm299 = vcmp.eq.f32.partialorder %v296, %v298
    %v300 = vsel %vm299, %v295, inf
    %301 = vmin.xlane.f32.xlu0 %v300
    %v302 = vpop.xlane.xlu0 %301
    %v303 = vcvt.f32.s32 %v302
    %v304 = vcvt.f32.s32 %v298
    %v305 = vshll.u32 %v304, 16
    %v306 = vadd.s32 %v305, %v303
    %v307 = vsel %vm44, %v123, 2147483647
    %v308 = vand.u32 %v307, 65535
    %v309 = vshra.s32 %v307, 16
    %v310 = vcvt.s32.f32 %v308
    %v311 = vcvt.s32.f32 %v309
    %312 = vmin.xlane.f32.xlu0 %v311
    %v313 = vpop.xlane.xlu0 %312
    %vm314 = vcmp.eq.f32.partialorder %v311, %v313
    %v315 = vsel %vm314, %v310, inf
    %316 = vmin.xlane.f32.xlu0 %v315
    %v317 = vpop.xlane.xlu0 %316
    %v318 = vcvt.f32.s32 %v317
    %v319 = vcvt.f32.s32 %v313
    %v320 = vshll.u32 %v319, 16
    %v321 = vadd.s32 %v320, %v318
    %v322 = vsel %vm44, %v124, 2147483647
    %v323 = vand.u32 %v322, 65535
    %v324 = vshra.s32 %v322, 16
    %v325 = vcvt.s32.f32 %v323
    %v326 = vcvt.s32.f32 %v324
    %327 = vmin.xlane.f32.xlu0 %v326
    %v328 = vpop.xlane.xlu0 %327
    %vm329 = vcmp.eq.f32.partialorder %v326, %v328
    %v330 = vsel %vm329, %v325, inf
    %331 = vmin.xlane.f32.xlu0 %v330
    %v332 = vpop.xlane.xlu0 %331
    %v333 = vcvt.f32.s32 %v332
    %v334 = vcvt.f32.s32 %v328
    %v335 = vshll.u32 %v334, 16
    %v336 = vadd.s32 %v335, %v333
    %v337 = vsel %vm44, %v125, 2147483647
    %v338 = vand.u32 %v337, 65535
    %v339 = vshra.s32 %v337, 16
    %v340 = vcvt.s32.f32 %v338
    %v341 = vcvt.s32.f32 %v339
    %342 = vmin.xlane.f32.xlu0 %v341
    %v343 = vpop.xlane.xlu0 %342
    %vm344 = vcmp.eq.f32.partialorder %v341, %v343
    %v345 = vsel %vm344, %v340, inf
    %346 = vmin.xlane.f32.xlu0 %v345
    %v347 = vpop.xlane.xlu0 %346
    %v348 = vcvt.f32.s32 %v347
    %v349 = vcvt.f32.s32 %v343
    %v350 = vshll.u32 %v349, 16
    %v351 = vadd.s32 %v350, %v348
    %v352 = vsel %vm44, %v126, 2147483647
    %v353 = vand.u32 %v352, 65535
    %v354 = vshra.s32 %v352, 16
    %v355 = vcvt.s32.f32 %v353
    %v356 = vcvt.s32.f32 %v354
    %357 = vmin.xlane.f32.xlu0 %v356
    %v358 = vpop.xlane.xlu0 %357
    %vm359 = vcmp.eq.f32.partialorder %v356, %v358
    %v360 = vsel %vm359, %v355, inf
    %361 = vmin.xlane.f32.xlu0 %v360
    %v362 = vpop.xlane.xlu0 %361
    %v363 = vcvt.f32.s32 %v362
    %v364 = vcvt.f32.s32 %v358
    %v365 = vshll.u32 %v364, 16
    %v366 = vadd.s32 %v365, %v363
    %vm367 = vcmp.eq.s32.totalorder %v141, %v28
    %vm368 = vcmp.eq.s32.totalorder %v156, %v29
    %vm369 = vcmp.eq.s32.totalorder %v171, %v30
    %vm370 = vcmp.eq.s32.totalorder %v186, %v31
    %vm371 = vcmp.eq.s32.totalorder %v201, %v32
    %vm372 = vcmp.eq.s32.totalorder %v216, %v33
    %vm373 = vcmp.eq.s32.totalorder %v231, %v34
    %vm374 = vcmp.eq.s32.totalorder %v246, %v35
    %vm375 = vcmp.eq.s32.totalorder %v261, %v36
    %vm376 = vcmp.eq.s32.totalorder %v276, %v37
    %vm377 = vcmp.eq.s32.totalorder %v291, %v38
    %vm378 = vcmp.eq.s32.totalorder %v306, %v39
    %vm379 = vcmp.eq.s32.totalorder %v321, %v40
    %vm380 = vcmp.eq.s32.totalorder %v336, %v41
    %vm381 = vcmp.eq.s32.totalorder %v351, %v42
    %vm382 = vcmp.eq.s32.totalorder %v366, %v43
    %v383 = vsel %vm367, 1, 0
    %v384 = vsel %vm368, 1, 0
    %v385 = vsel %vm369, 1, 0
    %v386 = vsel %vm370, 1, 0
    %v387 = vsel %vm371, 1, 0
    %v388 = vsel %vm372, 1, 0
    %v389 = vsel %vm373, 1, 0
    %v390 = vsel %vm374, 1, 0
    %v391 = vsel %vm375, 1, 0
    %v392 = vsel %vm376, 1, 0
    %v393 = vsel %vm377, 1, 0
    %v394 = vsel %vm378, 1, 0
    %v395 = vsel %vm379, 1, 0
    %v396 = vsel %vm380, 1, 0
    %v397 = vsel %vm381, 1, 0
    %v398 = vsel %vm382, 1, 0
    %v399 = vcvt.s32.f32 %v383
    %v400 = vcvt.s32.f32 %v384
    %v401 = vcvt.s32.f32 %v385
    %v402 = vcvt.s32.f32 %v386
    %v403 = vcvt.s32.f32 %v387
    %v404 = vcvt.s32.f32 %v388
    %v405 = vcvt.s32.f32 %v389
    %v406 = vcvt.s32.f32 %v390
    %v407 = vcvt.s32.f32 %v391
    %v408 = vcvt.s32.f32 %v392
    %v409 = vcvt.s32.f32 %v393
    %v410 = vcvt.s32.f32 %v394
    %v411 = vcvt.s32.f32 %v395
    %v412 = vcvt.s32.f32 %v396
    %v413 = vcvt.s32.f32 %v397
    %v414 = vcvt.s32.f32 %v398
    %s415 = smul.u32 0, 128
    %v416 = vlaneseq
    %v417 = vshrl.u32 %v416, 7
    %v418 = vadd.s32 %v417, 8
    %v419 = vadd.s32 %v417, 16
    %v420 = vadd.s32 %v417, 24
    %v421 = vadd.s32 %v417, 32
    %v422 = vadd.s32 %v417, 40
    %v423 = vadd.s32 %v417, 48
    %v424 = vadd.s32 %v417, 56
    %v425 = vadd.s32 %v417, 64
    %v426 = vadd.s32 %v417, 72
    %v427 = vadd.s32 %v417, 80
    %v428 = vadd.s32 %v417, 88
    %v429 = vadd.s32 %v417, 96
    %v430 = vadd.s32 %v417, 104
    %v431 = vadd.s32 %v417, 112
    %v432 = vadd.s32 %v417, 120
    %v433 = vstv %s415
    %v434 = vadd.s32 %v433, %v417
    %v435 = vadd.s32 %v433, %v418
    %v436 = vadd.s32 %v433, %v419
    %v437 = vadd.s32 %v433, %v420
    %v438 = vadd.s32 %v433, %v421
    %v439 = vadd.s32 %v433, %v422
    %v440 = vadd.s32 %v433, %v423
    %v441 = vadd.s32 %v433, %v424
    %v442 = vadd.s32 %v433, %v425
    %v443 = vadd.s32 %v433, %v426
    %v444 = vadd.s32 %v433, %v427
    %v445 = vadd.s32 %v433, %v428
    %v446 = vadd.s32 %v433, %v429
    %v447 = vadd.s32 %v433, %v430
    %v448 = vadd.s32 %v433, %v431
    %v449 = vadd.s32 %v433, %v432
    %vm450 = vcmp.lt.s32.totalorder %v434, 128
    %vm451 = vcmp.lt.s32.totalorder %v435, 128
    %vm452 = vcmp.lt.s32.totalorder %v436, 128
    %vm453 = vcmp.lt.s32.totalorder %v437, 128
    %vm454 = vcmp.lt.s32.totalorder %v438, 128
    %vm455 = vcmp.lt.s32.totalorder %v439, 128
    %vm456 = vcmp.lt.s32.totalorder %v440, 128
    %vm457 = vcmp.lt.s32.totalorder %v441, 128
    %vm458 = vcmp.lt.s32.totalorder %v442, 128
    %vm459 = vcmp.lt.s32.totalorder %v443, 128
    %vm460 = vcmp.lt.s32.totalorder %v444, 128
    %vm461 = vcmp.lt.s32.totalorder %v445, 128
    %vm462 = vcmp.lt.s32.totalorder %v446, 128
    %vm463 = vcmp.lt.s32.totalorder %v447, 128
    %vm464 = vcmp.lt.s32.totalorder %v448, 128
    %vm465 = vcmp.lt.s32.totalorder %v449, 128
    %v466 = vsel %vm450, %v47, 0.0
    %v467 = vsel %vm451, %v50, 0.0
    %v468 = vsel %vm452, %v53, 0.0
    %v469 = vsel %vm453, %v56, 0.0
    %v470 = vsel %vm454, %v59, 0.0
    %v471 = vsel %vm455, %v62, 0.0
    %v472 = vsel %vm456, %v65, 0.0
    %v473 = vsel %vm457, %v68, 0.0
    %v474 = vsel %vm458, %v71, 0.0
    %v475 = vsel %vm459, %v74, 0.0
    %v476 = vsel %vm460, %v77, 0.0
    %v477 = vsel %vm461, %v80, 0.0
    %v478 = vsel %vm462, %v83, 0.0
    %v479 = vsel %vm463, %v86, 0.0
    %v480 = vsel %vm464, %v89, 0.0
    %v481 = vsel %vm465, %v92, 0.0
    %v482 = vmul.f32 %v466, 15.0
    %v483 = vmul.f32 %v467, 15.0
    %v484 = vmul.f32 %v468, 15.0
    %v485 = vmul.f32 %v469, 15.0
    %v486 = vmul.f32 %v470, 15.0
    %v487 = vmul.f32 %v471, 15.0
    %v488 = vmul.f32 %v472, 15.0
    %v489 = vmul.f32 %v473, 15.0
    %v490 = vmul.f32 %v474, 15.0
    %v491 = vmul.f32 %v475, 15.0
    %v492 = vmul.f32 %v476, 15.0
    %v493 = vmul.f32 %v477, 15.0
    %v494 = vmul.f32 %v478, 15.0
    %v495 = vmul.f32 %v479, 15.0
    %v496 = vmul.f32 %v480, 15.0
    %v497 = vmul.f32 %v481, 15.0
    %v498 = vceil.f32 %v482
    %v499 = vceil.f32 %v483
    %v500 = vceil.f32 %v484
    %v501 = vceil.f32 %v485
    %v502 = vceil.f32 %v486
    %v503 = vceil.f32 %v487
    %v504 = vceil.f32 %v488
    %v505 = vceil.f32 %v489
    %v506 = vceil.f32 %v490
    %v507 = vceil.f32 %v491
    %v508 = vceil.f32 %v492
    %v509 = vceil.f32 %v493
    %v510 = vceil.f32 %v494
    %v511 = vceil.f32 %v495
    %v512 = vceil.f32 %v496
    %v513 = vceil.f32 %v497
    %v514 = vsub.f32 %v498, 1.0
    %v515 = vsub.f32 %v499, 1.0
    %v516 = vsub.f32 %v500, 1.0
    %v517 = vsub.f32 %v501, 1.0
    %v518 = vsub.f32 %v502, 1.0
    %v519 = vsub.f32 %v503, 1.0
    %v520 = vsub.f32 %v504, 1.0
    %v521 = vsub.f32 %v505, 1.0
    %v522 = vsub.f32 %v506, 1.0
    %v523 = vsub.f32 %v507, 1.0
    %v524 = vsub.f32 %v508, 1.0
    %v525 = vsub.f32 %v509, 1.0
    %v526 = vsub.f32 %v510, 1.0
    %v527 = vsub.f32 %v511, 1.0
    %v528 = vsub.f32 %v512, 1.0
    %v529 = vsub.f32 %v513, 1.0
    %v530 = vcvt.f32.s32.to.zero.pseudo %v514
    %v531 = vcvt.f32.s32.to.zero.pseudo %v515
    %v532 = vcvt.f32.s32.to.zero.pseudo %v516
    %v533 = vcvt.f32.s32.to.zero.pseudo %v517
    %v534 = vcvt.f32.s32.to.zero.pseudo %v518
    %v535 = vcvt.f32.s32.to.zero.pseudo %v519
    %v536 = vcvt.f32.s32.to.zero.pseudo %v520
    %v537 = vcvt.f32.s32.to.zero.pseudo %v521
    %v538 = vcvt.f32.s32.to.zero.pseudo %v522
    %v539 = vcvt.f32.s32.to.zero.pseudo %v523
    %v540 = vcvt.f32.s32.to.zero.pseudo %v524
    %v541 = vcvt.f32.s32.to.zero.pseudo %v525
    %v542 = vcvt.f32.s32.to.zero.pseudo %v526
    %v543 = vcvt.f32.s32.to.zero.pseudo %v527
    %v544 = vcvt.f32.s32.to.zero.pseudo %v528
    %v545 = vcvt.f32.s32.to.zero.pseudo %v529
    %vm546 = vcmp.eq.s32.totalorder %v530, %v94
    %vm547 = vcmp.eq.s32.totalorder %v531, %v94
    %vm548 = vcmp.eq.s32.totalorder %v532, %v94
    %vm549 = vcmp.eq.s32.totalorder %v533, %v94
    %vm550 = vcmp.eq.s32.totalorder %v534, %v94
    %vm551 = vcmp.eq.s32.totalorder %v535, %v94
    %vm552 = vcmp.eq.s32.totalorder %v536, %v94
    %vm553 = vcmp.eq.s32.totalorder %v537, %v94
    %vm554 = vcmp.eq.s32.totalorder %v538, %v94
    %vm555 = vcmp.eq.s32.totalorder %v539, %v94
    %vm556 = vcmp.eq.s32.totalorder %v540, %v94
    %vm557 = vcmp.eq.s32.totalorder %v541, %v94
    %vm558 = vcmp.eq.s32.totalorder %v542, %v94
    %vm559 = vcmp.eq.s32.totalorder %v543, %v94
    %vm560 = vcmp.eq.s32.totalorder %v544, %v94
    %vm561 = vcmp.eq.s32.totalorder %v545, %v94
    %v562 = vsel %vm546, 1, 0
    %v563 = vsel %vm547, 1, 0
    %v564 = vsel %vm548, 1, 0
    %v565 = vsel %vm549, 1, 0
    %v566 = vsel %vm550, 1, 0
    %v567 = vsel %vm551, 1, 0
    %v568 = vsel %vm552, 1, 0
    %v569 = vsel %vm553, 1, 0
    %v570 = vsel %vm554, 1, 0
    %v571 = vsel %vm555, 1, 0
    %v572 = vsel %vm556, 1, 0
    %v573 = vsel %vm557, 1, 0
    %v574 = vsel %vm558, 1, 0
    %v575 = vsel %vm559, 1, 0
    %v576 = vsel %vm560, 1, 0
    %v577 = vsel %vm561, 1, 0
    %v578 = vcvt.s32.f32 %v562
    %v579 = vcvt.s32.f32 %v563
    %v580 = vcvt.s32.f32 %v564
    %v581 = vcvt.s32.f32 %v565
    %v582 = vcvt.s32.f32 %v566
    %v583 = vcvt.s32.f32 %v567
    %v584 = vcvt.s32.f32 %v568
    %v585 = vcvt.s32.f32 %v569
    %v586 = vcvt.s32.f32 %v570
    %v587 = vcvt.s32.f32 %v571
    %v588 = vcvt.s32.f32 %v572
    %v589 = vcvt.s32.f32 %v573
    %v590 = vcvt.s32.f32 %v574
    %v591 = vcvt.s32.f32 %v575
    %v592 = vcvt.s32.f32 %v576
    %v593 = vcvt.s32.f32 %v577
    %v594 = vmul.f32 %v466, %v578
    %v595 = vmul.f32 %v467, %v579
    %v596 = vmul.f32 %v468, %v580
    %v597 = vmul.f32 %v469, %v581
    %v598 = vmul.f32 %v470, %v582
    %v599 = vmul.f32 %v471, %v583
    %v600 = vmul.f32 %v472, %v584
    %v601 = vmul.f32 %v473, %v585
    %v602 = vmul.f32 %v474, %v586
    %v603 = vmul.f32 %v475, %v587
    %v604 = vmul.f32 %v476, %v588
    %v605 = vmul.f32 %v477, %v589
    %v606 = vmul.f32 %v478, %v590
    %v607 = vmul.f32 %v479, %v591
    %v608 = vmul.f32 %v480, %v592
    %v609 = vmul.f32 %v481, %v593
    %v610 = vadd.f32 %v594, %v595
    %v611 = vadd.f32 %v610, %v596
    %v612 = vadd.f32 %v611, %v597
    %v613 = vadd.f32 %v612, %v598
    %v614 = vadd.f32 %v613, %v599
    %v615 = vadd.f32 %v614, %v600
    %v616 = vadd.f32 %v615, %v601
    %v617 = vadd.f32 %v616, %v602
    %v618 = vadd.f32 %v617, %v603
    %v619 = vadd.f32 %v618, %v604
    %v620 = vadd.f32 %v619, %v605
    %v621 = vadd.f32 %v620, %v606
    %v622 = vadd.f32 %v621, %v607
    %v623 = vadd.f32 %v622, %v608
    %v624 = vadd.f32 %v623, %v609
    %v625 = vrot.slane %v624, 4
    %v626 = vadd.f32 %v624, %v625
    %v627 = vrot.slane %v626, 2
    %v628 = vadd.f32 %v626, %v627
    %v629 = vrot.slane %v628, 1
    %v630 = vadd.f32 %v628, %v629
    %632 = vset.pattern.permute.xlu0 0
    %633 = vperm.xlu0 %632, %v399
    %v634 = vpop.permute.xlu0 %633
    %637 = vset.pattern.permute.xlu0 0
    %638 = vperm.xlu0 %637, %v400
    %v639 = vpop.permute.xlu0 %638
    %642 = vset.pattern.permute.xlu0 0
    %643 = vperm.xlu0 %642, %v401
    %v644 = vpop.permute.xlu0 %643
    %647 = vset.pattern.permute.xlu0 0
    %648 = vperm.xlu0 %647, %v402
    %v649 = vpop.permute.xlu0 %648
    %652 = vset.pattern.permute.xlu0 0
    %653 = vperm.xlu0 %652, %v403
    %v654 = vpop.permute.xlu0 %653
    %657 = vset.pattern.permute.xlu0 0
    %658 = vperm.xlu0 %657, %v404
    %v659 = vpop.permute.xlu0 %658
    %662 = vset.pattern.permute.xlu0 0
    %663 = vperm.xlu0 %662, %v405
    %v664 = vpop.permute.xlu0 %663
    %667 = vset.pattern.permute.xlu0 0
    %668 = vperm.xlu0 %667, %v406
    %v669 = vpop.permute.xlu0 %668
    %672 = vset.pattern.permute.xlu0 0
    %673 = vperm.xlu0 %672, %v407
    %v674 = vpop.permute.xlu0 %673
    %677 = vset.pattern.permute.xlu0 0
    %678 = vperm.xlu0 %677, %v408
    %v679 = vpop.permute.xlu0 %678
    %682 = vset.pattern.permute.xlu0 0
    %683 = vperm.xlu0 %682, %v409
    %v684 = vpop.permute.xlu0 %683
    %687 = vset.pattern.permute.xlu0 0
    %688 = vperm.xlu0 %687, %v410
    %v689 = vpop.permute.xlu0 %688
    %692 = vset.pattern.permute.xlu0 0
    %693 = vperm.xlu0 %692, %v411
    %v694 = vpop.permute.xlu0 %693
    %697 = vset.pattern.permute.xlu0 0
    %698 = vperm.xlu0 %697, %v412
    %v699 = vpop.permute.xlu0 %698
    %702 = vset.pattern.permute.xlu0 0
    %703 = vperm.xlu0 %702, %v413
    %v704 = vpop.permute.xlu0 %703
    %707 = vset.pattern.permute.xlu0 0
    %708 = vperm.xlu0 %707, %v414
    %v709 = vpop.permute.xlu0 %708
    %v711 = vmul.f32 %v634, %v578
    %v712 = vmul.f32 %v639, %v579
    %v713 = vmul.f32 %v644, %v580
    %v714 = vmul.f32 %v649, %v581
    %v715 = vmul.f32 %v654, %v582
    %v716 = vmul.f32 %v659, %v583
    %v717 = vmul.f32 %v664, %v584
    %v718 = vmul.f32 %v669, %v585
    %v719 = vmul.f32 %v674, %v586
    %v720 = vmul.f32 %v679, %v587
    %v721 = vmul.f32 %v684, %v588
    %v722 = vmul.f32 %v689, %v589
    %v723 = vmul.f32 %v694, %v590
    %v724 = vmul.f32 %v699, %v591
    %v725 = vmul.f32 %v704, %v592
    %v726 = vmul.f32 %v709, %v593
    %v727 = vadd.f32 %v711, %v712
    %v728 = vadd.f32 %v727, %v713
    %v729 = vadd.f32 %v728, %v714
    %v730 = vadd.f32 %v729, %v715
    %v731 = vadd.f32 %v730, %v716
    %v732 = vadd.f32 %v731, %v717
    %v733 = vadd.f32 %v732, %v718
    %v734 = vadd.f32 %v733, %v719
    %v735 = vadd.f32 %v734, %v720
    %v736 = vadd.f32 %v735, %v721
    %v737 = vadd.f32 %v736, %v722
    %v738 = vadd.f32 %v737, %v723
    %v739 = vadd.f32 %v738, %v724
    %v740 = vadd.f32 %v739, %v725
    %v741 = vadd.f32 %v740, %v726
    %v742 = vrot.slane %v741, 4
    %v743 = vadd.f32 %v741, %v742
    %v744 = vrot.slane %v743, 2
    %v745 = vadd.f32 %v743, %v744
    %v746 = vrot.slane %v745, 1
    %v747 = vadd.f32 %v745, %v746
    %vm748 = vcmask 1040384
    %v749 = vsel %vm748, %v630, %v747
    %750 = vst [vmem:[#allocation2] sm:$0x3] %v749
    // Predicated region
    $region10: #{tpu_custom_call.1} parent=1 // pred_check
      _
    $region11: #{tpu_custom_call.1} parent=1 // pred_check_branch
      %752 = sbr.rel (0) target = $region13
    $region12: #{tpu_custom_call.1} parent=1 // pred_region
      %s754 = ssub.s32 32, 32
      %755 = vsyncadd [#allocation3], %s754
      %s757 = sshll.u32 [#allocation2], 4
      %s758 = int_to_ptr.vmem [resolvable:$true] %s757
      %760 = dma.vmem_to_hbm [thread:$0]  %s758, 32, %s2, [#allocation3]
    $region13: #{tpu_custom_call.1} parent=1 // pred_fallthru
      _
    // Predicated region
    $region14: #{tpu_custom_call.1} parent=1 // pred_check
      _
    $region15: #{tpu_custom_call.1} parent=1 // pred_check_branch
      %762 = sbr.rel (0) target = $region17
    $region16: #{tpu_custom_call.1} parent=1 // pred_region
      %763 = dma.done [#allocation3], 32
    $region17: #{tpu_custom_call.1} parent=1 // pred_fallthru
      _
    %764 = vsyncpa [#allocation3], 1

</llo_original>
